<compile_context>
chip_gen: v6e
topology: v6e:2x2x1
jax: 0.10.0
libtpu: 0.0.40
codegen_flags: <defaults>
</compile_context>

<pallas_src>
import functools

import jax
import jax.numpy as jnp
from jax import lax
from jax.experimental import pallas as pl
from jax.experimental.pallas import tpu as pltpu

LANES = 128            # vreg lane width; last dim of the 2-D slab
SUBLANE_ALIGN = 32     # row multiple keeping packed sublanes full for f32/bf16/int8/fp8
_VMEM_BUDGET = 8 << 20  # double-buffered in+out blocks stay under v5e's 16 MiB scoped default


def _copy_kernel(x_ref, o_ref):
    # keep path: pure streaming copy, pipelined by BlockSpec (1 HBM read + 1 write)
    o_ref[...] = x_ref[...]


def _zeros_kernel(o_ref):
    # drop path: write-only — x is never read from HBM
    o_ref[...] = jnp.zeros_like(o_ref)


def _round_down(x, m):
    return (x // m) * m


def _round_up(x, m):
    return ((x + m - 1) // m) * m


def _pick_block_rows(rows, itemsize, requested):
    """Tile height: as large as possible while keeping 2 buffers x (in + out)
    blocks within the VMEM budget, aligned to the packed-sublane granularity."""
    max_rows_vmem = max(SUBLANE_ALIGN, _VMEM_BUDGET // (4 * LANES * itemsize))
    br = max(SUBLANE_ALIGN, _round_down(min(requested, max_rows_vmem), SUBLANE_ALIGN))
    if rows <= br:
        # Whole slab fits in one tile.  If it is big enough, split in two so the
        # grid has >=2 parallel steps (v7x megacore sharding); otherwise use a
        # single full-extent block (always legal w.r.t. the (8,128) rule).
        if rows >= 2 * 8 * SUBLANE_ALIGN:
            return _round_up((rows + 1) // 2, SUBLANE_ALIGN)
        return rows
    return br


def _run_2d(x2d, keep, block_rows):
    """Run the keep/drop kernel on a lane-dense (rows, 128) slab."""
    rows, lanes = x2d.shape
    itemsize = jnp.dtype(x2d.dtype).itemsize
    br = _pick_block_rows(rows, itemsize, block_rows)
    grid = (pl.cdiv(rows, br),)
    out_shape = jax.ShapeDtypeStruct((rows, lanes), x2d.dtype)
    block_spec = pl.BlockSpec((br, lanes), lambda i: (i, 0))
    cparams = pltpu.CompilerParams(dimension_semantics=("parallel",))

    def _keep_branch():
        return pl.pallas_call(
            _copy_kernel,
            out_shape=out_shape,
            grid=grid,
            in_specs=[block_spec],
            out_specs=block_spec,
            compiler_params=cparams,
            cost_estimate=pl.CostEstimate(
                flops=0, transcendentals=0,
                bytes_accessed=2 * rows * lanes * itemsize),
        )(x2d)

    def _drop_branch():
        return pl.pallas_call(
            _zeros_kernel,
            out_shape=out_shape,
            grid=grid,
            out_specs=block_spec,
            compiler_params=cparams,
            cost_estimate=pl.CostEstimate(
                flops=0, transcendentals=0,
                bytes_accessed=rows * lanes * itemsize),
        )()

    return lax.cond(keep, _keep_branch, _drop_branch)


@functools.partial(jax.jit, static_argnames=("p", "training", "block_rows"))
def stochastic_depth(x, key, *, p=0.5, training=True, block_rows=1024):
    """Pallas implementation of StochasticDepth.forward.

    x:   NCHW float tensor
    key: jax PRNG key used for the single Bernoulli draw
    """
    if not training:
        return x  # eval path is identity — no kernel needed

    # single scalar draw; `u > p` keeps, exactly matching `torch.rand(1)[0] > self.p`
    u = jax.random.uniform(key, (), dtype=jnp.float32)
    keep = u > p

    orig_shape = x.shape
    total = x.size

    if total % LANES == 0:
        # free bitcast on contiguous data — no pad / slice round-trip
        x2d = x.reshape(total // LANES, LANES)
        out2d = _run_2d(x2d, keep, block_rows)
        return out2d.reshape(orig_shape)

    # Ragged fallback (rare for conv feature maps): pad only up to the next
    # lane multiple, run, slice back.
    padded_total = _round_up(total, LANES)
    flat = jnp.pad(jnp.ravel(x), (0, padded_total - total))
    out2d = _run_2d(flat.reshape(padded_total // LANES, LANES), keep, block_rows)
    return out2d.reshape(-1)[:total].reshape(orig_shape)


if __name__ == "__main__":
    key = jax.random.PRNGKey(0)
    k_x, k_drop = jax.random.split(key)

    # small NCHW input consistent with a conv-net feature map
    x = jax.random.normal(k_x, (2, 4, 16, 16), dtype=jnp.float32)
    p = 0.5

    # --- training=True, random draw (kernel selected by the draw) ---
    y = jax.block_until_ready(stochastic_depth(x, k_drop, p=p, training=True))
    u = jax.random.uniform(k_drop, (), dtype=jnp.float32)
    y_ref = jnp.where(u > p, x, jnp.zeros_like(x))
    assert y.shape == x.shape and y.dtype == x.dtype
    assert jnp.allclose(y, y_ref), "mismatch vs reference"

    # --- force drop (p=1.0 -> u > 1 never true): exercises the zero-fill kernel ---
    y_drop = jax.block_until_ready(stochastic_depth(x, k_drop, p=1.0, training=True))
    assert jnp.allclose(y_drop, jnp.zeros_like(x))

    # --- force keep (p=-1.0 -> u > -1 always true): exercises the copy kernel ---
    y_keep = jax.block_until_ready(stochastic_depth(x, k_drop, p=-1.0, training=True))
    assert jnp.allclose(y_keep, x)

    # --- bf16 dtype path ---
    x_bf = x.astype(jnp.bfloat16)
    y_bf = jax.block_until_ready(stochastic_depth(x_bf, k_drop, p=-1.0, training=True))
    assert y_bf.dtype == jnp.bfloat16 and jnp.allclose(y_bf, x_bf)

    # --- ragged size (total % 128 != 0) fallback path ---
    x_rag = jax.random.normal(k_x, (3, 5, 7, 3), dtype=jnp.float32)
    y_rag0 = jax.block_until_ready(stochastic_depth(x_rag, k_drop, p=1.0, training=True))
    y_rag1 = jax.block_until_ready(stochastic_depth(x_rag, k_drop, p=-1.0, training=True))
    assert jnp.allclose(y_rag0, jnp.zeros_like(x_rag)) and jnp.allclose(y_rag1, x_rag)

    # --- eval path (identity, no kernel) ---
    y_eval = jax.block_until_ready(stochastic_depth(x, k_drop, p=p, training=False))
    assert jnp.allclose(y_eval, x)

    print("KERNEL_OK")
</pallas_src>

<mosaic_0001>
module attributes {stable_mosaic.version = 11 : i64} {
  func.func @_zeros_kernel(%arg0: i32, %arg1: memref<16x128xf32, #tpu.memory_space<vmem>>) attributes {dimension_semantics = [#tpu.dimension_semantics<parallel>], iteration_bounds = array<i64: 1>, scalar_prefetch = 0 : i64, scratch_operands = 0 : i64, tpu.core_type = #tpu.core_type<tc>, window_params = [{transform_indices = @transform_0, window_bounds = array<i64: 16, 128>}]} {
    %cst = arith.constant 0.000000e+00 : f32
    %0 = vector.broadcast %cst : f32 to vector<16x128xf32>
    %c0 = arith.constant 0 : index
    %c0_0 = arith.constant 0 : index
    %1 = vector.load %arg1[%c0, %c0_0] : memref<16x128xf32, #tpu.memory_space<vmem>>, vector<16x128xf32>
    tpu.vector_store %arg1[%c0, %c0_0], %0 {strides = array<i32>} : memref<16x128xf32, #tpu.memory_space<vmem>>, vector<16x128xf32>,
    return
  }
  func.func @transform_0(%arg0: i32) -> (i32, i32) {
    %c0_i32 = arith.constant 0 : i32
    %c0_i32_0 = arith.constant 0 : i32
    return %arg0, %c0_i32 : i32, i32
  }
}

module attributes {stable_mosaic.version = 11 : i64} {
  func.func @_copy_kernel(%arg0: i32, %arg1: memref<16x128xf32, #tpu.memory_space<vmem>>, %arg2: memref<16x128xf32, #tpu.memory_space<vmem>>) attributes {dimension_semantics = [#tpu.dimension_semantics<parallel>], iteration_bounds = array<i64: 1>, scalar_prefetch = 0 : i64, scratch_operands = 0 : i64, tpu.core_type = #tpu.core_type<tc>, window_params = [{transform_indices = @transform_0, window_bounds = array<i64: 16, 128>}, {transform_indices = @transform_1, window_bounds = array<i64: 16, 128>}]} {
    %c0 = arith.constant 0 : index
    %c0_0 = arith.constant 0 : index
    %0 = vector.load %arg1[%c0, %c0_0] : memref<16x128xf32, #tpu.memory_space<vmem>>, vector<16x128xf32>
    %c0_1 = arith.constant 0 : index
    %c0_2 = arith.constant 0 : index
    %1 = vector.load %arg2[%c0_1, %c0_2] : memref<16x128xf32, #tpu.memory_space<vmem>>, vector<16x128xf32>
    tpu.vector_store %arg2[%c0_1, %c0_2], %0 {strides = array<i32>} : memref<16x128xf32, #tpu.memory_space<vmem>>, vector<16x128xf32>,
    return
  }
  func.func @transform_0(%arg0: i32) -> (i32, i32) {
    %c0_i32 = arith.constant 0 : i32
    %c0_i32_0 = arith.constant 0 : i32
    return %arg0, %c0_i32 : i32, i32
  }
  func.func @transform_1(%arg0: i32) -> (i32, i32) {
    %c0_i32 = arith.constant 0 : i32
    %c0_i32_0 = arith.constant 0 : i32
    return %arg0, %c0_i32 : i32, i32
  }
}

</mosaic_0001>

<llo_original>
// kernel: branch_1_fun.1
$region0: #{branch_1_fun.1}
  #allocation0 [shape = 'u32[]', space=smem, size = 0x4, offset = 0x4, fixed_abs, tag = 'smem constant byte address 0x4 - core index']
  #allocation1 [shape = 'u32[144,128]{1,0:T(1,128)}', space=vmem, size = 0x12000, scoped, tag = 'internal scratch']
  %s0 = inlined_call_operand.vmem [shape: f32[16,128], index: 0, kind: input, shape index: {}]
  %s1 = inlined_call_operand.vmem [shape: f32[16,128], index: 1, kind: output, shape index: {}]
  %s2 = sld [smem:[#allocation0]]
  $region14: #{branch_1_fun.1} parent=0
    _
  %s4 = ssub.s32 1, %s2
  %s5 = scalar_select 0, %s4, %s2
  // Predicated region
  $region2: #{branch_1_fun.1} parent=0 // pred_check
    _
  $region3: #{branch_1_fun.1} parent=0 // pred_check_branch
    %7 = sbr.rel (0) target = $region5
  $region4: #{branch_1_fun.1} parent=0 // pred_region
    _
  $region5: #{branch_1_fun.1} parent=0 // pred_fallthru
    _
  %v8 = vld [vmem:[%s0] sm:$0xff]
  %v9 = vld [vmem:[%s0 + $0x8] sm:$0xff]
  %10 = vst [vmem:[%s1] sm:$0xff] %v8
  %11 = vst [vmem:[%s1 + $0x8] sm:$0xff] %v9
  // Predicated region
  $region6: #{branch_1_fun.1} parent=0 // pred_check
    _
  $region7: #{branch_1_fun.1} parent=0 // pred_check_branch
    %13 = sbr.rel (0) target = $region9
  $region8: #{branch_1_fun.1} parent=0 // pred_region
    _
  $region9: #{branch_1_fun.1} parent=0 // pred_fallthru
    _
  // Predicated region
  $region10: #{branch_1_fun.1} parent=0 // pred_check
    _
  $region11: #{branch_1_fun.1} parent=0 // pred_check_branch
    %15 = sbr.rel (0) target = $region13
  $region12: #{branch_1_fun.1} parent=0 // pred_region
    _
  $region13: #{branch_1_fun.1} parent=0 // pred_fallthru
    _

// kernel: branch_0_fun.1
$region0: #{branch_0_fun.1}
  #allocation0 [shape = 'u32[]', space=smem, size = 0x4, offset = 0x4, fixed_abs, tag = 'smem constant byte address 0x4 - core index']
  #allocation1 [shape = 'u32[144,128]{1,0:T(1,128)}', space=vmem, size = 0x12000, scoped, tag = 'internal scratch']
  %s0 = inlined_call_operand.vmem [shape: f32[16,128], index: 0, kind: output, shape index: {}]
  %s1 = sld [smem:[#allocation0]]
  $region10: #{branch_0_fun.1} parent=0
    _
  %s3 = ssub.s32 1, %s1
  %s4 = scalar_select 0, %s3, %s1
  %5 = vst [vmem:[%s0] sm:$0xff] 0.0
  %6 = vst [vmem:[%s0 + $0x8] sm:$0xff] 0.0
  // Predicated region
  $region2: #{branch_0_fun.1} parent=0 // pred_check
    _
  $region3: #{branch_0_fun.1} parent=0 // pred_check_branch
    %8 = sbr.rel (0) target = $region5
  $region4: #{branch_0_fun.1} parent=0 // pred_region
    _
  $region5: #{branch_0_fun.1} parent=0 // pred_fallthru
    _
  // Predicated region
  $region6: #{branch_0_fun.1} parent=0 // pred_check
    _
  $region7: #{branch_0_fun.1} parent=0 // pred_check_branch
    %10 = sbr.rel (0) target = $region9
  $region8: #{branch_0_fun.1} parent=0 // pred_region
    _
  $region9: #{branch_0_fun.1} parent=0 // pred_fallthru
    _

</llo_original>
